<compile_context>
chip_gen: v5e
topology: v5e:2x2
jax: 0.10.0
libtpu: 0.0.40
codegen_flags: <defaults>
</compile_context>

<pallas_src>
import functools

import jax
import jax.numpy as jnp
import numpy as np
from jax.experimental import pallas as pl
from jax.experimental.pallas import tpu as pltpu

LANE = 128
NUM_CORES = 2                  # per-core partial accumulators (v7x megacore)
TARGET_BLOCK_BYTES = 4 << 20   # 4 MiB per input per pipeline buffer
VMEM_LIMIT_BYTES = 40 * 1024 * 1024  # explicit: >16 MiB v5e default, <64 MiB v7x


def _cdiv(a, b):
    return -(-a // b)


def _round_up(x, m):
    return ((x + m - 1) // m) * m


def _acc_moments_kernel(fc_ref, tr_ref, cl_ref, out_ref, *,
                        std, steps_per_core, block_rows, rows_valid,
                        need_mask):
    """Accumulate the 5 moments of (fa, a) into a resident (5, 8, 128) block."""
    c = pl.program_id(0)   # core / partial index  ("parallel")
    s = pl.program_id(1)   # streaming step        ("arbitrary", accumulator axis)

    @pl.when(s == 0)
    def _():
        out_ref[...] = jnp.zeros_like(out_ref)

    fc = fc_ref[...].astype(jnp.float32)
    tr = tr_ref[...].astype(jnp.float32)
    cl = cl_ref[...].astype(jnp.float32)

    # '+ mean' of the reference formula cancels exactly after global centering,
    # so it is dropped (saves VPU adds, tightens f32 cancellation).
    fa = fc * std - cl
    a = tr * std - cl

    def accumulate(f, g):
        def part(x):
            # (block_rows, 128) -> (8, 128): VPU vreg adds only.
            return jnp.sum(x.reshape(block_rows // 8, 8, LANE), axis=0)
        out_ref[0, 0, :, :] += part(f)
        out_ref[0, 1, :, :] += part(g)
        out_ref[0, 2, :, :] += part(f * f)
        out_ref[0, 3, :, :] += part(g * g)
        out_ref[0, 4, :, :] += part(f * g)

    if not need_mask:
        accumulate(fa, a)
    else:
        start_row = (c * steps_per_core + s) * block_rows
        is_edge = start_row + block_rows > rows_valid

        @pl.when(jnp.logical_not(is_edge))
        def _():
            accumulate(fa, a)           # hot path: no masking work at all

        @pl.when(is_edge)
        def _():
            # Row-threshold mask only (within-row 128-tail is zero-padded in
            # HBM and contributes nothing since '+ mean' was dropped).
            row = start_row + jax.lax.broadcasted_iota(
                jnp.int32, (block_rows, LANE), 0)
            valid = row < rows_valid
            accumulate(jnp.where(valid, fa, 0.0), jnp.where(valid, a, 0.0))


def acc_loss(da_fc, da_true, clim, std, mean):
    """1 - ACC, matching ACCLoss.forward. std/mean are Python scalars."""
    # TODO(synk): std/mean are baked as trace-time scalars; per-channel arrays
    # from the pickled scaler would need a channel-aware (non-flattened) layout.
    assert da_fc.shape == da_true.shape
    del mean  # cancels exactly under the centered-moment formula
    if clim.shape != da_fc.shape:
        # TODO(synk): stream a small climatology via a modulo BlockSpec instead
        # of materializing the broadcast in HBM.
        clim = jnp.broadcast_to(clim, da_fc.shape)

    n = int(np.prod(da_fc.shape))
    rows = _cdiv(n, LANE)
    lane_pad = rows * LANE - n          # < 128 elements; zero when n % 128 == 0

    itemsizes = [np.dtype(x.dtype).itemsize for x in (da_fc, da_true, clim)]
    gran = max(8, max(32 // it for it in itemsizes))        # sublane packing
    max_block_rows = _round_up(TARGET_BLOCK_BYTES // (LANE * max(itemsizes)),
                               gran)                         # 8192 f32 / 16384 bf16

    block_rows = min(max_block_rows, _round_up(_cdiv(rows, NUM_CORES), gran))
    num_blocks = _cdiv(rows, block_rows)
    num_cores = NUM_CORES if num_blocks >= NUM_CORES else 1
    steps_per_core = _cdiv(num_blocks, num_cores)
    need_mask = (rows % block_rows != 0) or (num_cores * steps_per_core != num_blocks)

    def to2d(x):
        x = x.reshape(-1)
        if lane_pad:
            # Tiny (<128 elem) zero pad only; padded elements contribute 0 to
            # every moment because '+ mean' is dropped.
            x = jnp.pad(x, (0, lane_pad))
        return x.reshape(rows, LANE)

    fc2, tr2, cl2 = to2d(da_fc), to2d(da_true), to2d(clim)

    kernel = functools.partial(
        _acc_moments_kernel,
        std=float(std), steps_per_core=steps_per_core, block_rows=block_rows,
        rows_valid=rows, need_mask=need_mask)

    if num_cores * steps_per_core == num_blocks:
        idx_map = lambda c, s: (c * steps_per_core + s, 0)
    else:
        # Clamp phantom trailing blocks onto the last valid block; the kernel's
        # row mask zeroes their contribution.
        idx_map = lambda c, s: (
            jnp.minimum(c * steps_per_core + s, num_blocks - 1), 0)

    in_spec = pl.BlockSpec((block_rows, LANE), idx_map)

    parts = pl.pallas_call(
        kernel,
        out_shape=jax.ShapeDtypeStruct((num_cores, 5, 8, LANE), jnp.float32),
        grid_spec=pltpu.PrefetchScalarGridSpec(
            num_scalar_prefetch=0,
            grid=(num_cores, steps_per_core),
            in_specs=[in_spec, in_spec, in_spec],
            out_specs=pl.BlockSpec((1, 5, 8, LANE), lambda c, s: (c, 0, 0, 0)),
        ),
        compiler_params=pltpu.CompilerParams(
            dimension_semantics=("parallel", "arbitrary"),
            vmem_limit_bytes=VMEM_LIMIT_BYTES,
        ),
    )(fc2, tr2, cl2)

    # Tiny epilogue in JAX: combine per-core / per-lane partials, apply the
    # centered-moment formula, and form 1 - acc.
    sums = jnp.sum(parts, axis=(0, 2, 3))  # (5,) = S_f, S_a, S_ff, S_aa, S_fa
    s_f, s_a, s_ff, s_aa, s_fa = sums[0], sums[1], sums[2], sums[3], sums[4]
    inv_n = jnp.float32(1.0 / n)
    cov = s_fa - s_f * s_a * inv_n        # sum(fa' * a')
    var_f = s_ff - s_f * s_f * inv_n      # sum(fa'^2)
    var_a = s_aa - s_a * s_a * inv_n      # sum(a'^2)
    acc = cov / jnp.sqrt(var_f * var_a)
    return 1.0 - acc


if __name__ == "__main__":
    # Small, deterministic example consistent with the module's 4-D usage.
    B, C, H, W = 2, 4, 16, 16

    key = jax.random.PRNGKey(0)
    k1, k2, k3 = jax.random.split(key, 3)
    da_fc = jax.random.normal(k1, (B, C, H, W), dtype=jnp.float32)
    da_true = jax.random.normal(k2, (B, C, H, W), dtype=jnp.float32)
    clim = jax.random.normal(k3, (B, C, H, W), dtype=jnp.float32)
    std, mean = 2.5, 0.75  # stand-ins for the pickled scaler's scalars

    loss = acc_loss(da_fc, da_true, clim, std, mean)
    loss = jax.block_until_ready(loss)

    # Pure-JAX reference with the exact PyTorch (two-pass) formula.
    fa = da_fc * std + mean - clim
    a = da_true * std + mean - clim
    fa_p = fa - jnp.mean(fa)
    a_p = a - jnp.mean(a)
    ref_acc = jnp.sum(fa_p * a_p) / jnp.sqrt(jnp.sum(fa_p ** 2) * jnp.sum(a_p ** 2))
    ref = 1.0 - ref_acc
    np.testing.assert_allclose(np.asarray(loss), np.asarray(ref),
                               rtol=1e-4, atol=1e-5)

    print("KERNEL_OK")
</pallas_src>

<mosaic_0001>
module attributes {stable_mosaic.version = 11 : i64} {
  func.func @_acc_moments_kernel(%arg0: i32, %arg1: i32, %arg2: memref<8x128xf32, #tpu.memory_space<vmem>>, %arg3: memref<8x128xf32, #tpu.memory_space<vmem>>, %arg4: memref<8x128xf32, #tpu.memory_space<vmem>>, %arg5: memref<1x5x8x128xf32, #tpu.memory_space<vmem>>) attributes {dimension_semantics = [#tpu.dimension_semantics<parallel>, #tpu.dimension_semantics<arbitrary>], iteration_bounds = array<i64: 2, 1>, scalar_prefetch = 0 : i64, scratch_operands = 0 : i64, tpu.core_type = #tpu.core_type<tc>, window_params = [{transform_indices = @transform_0, window_bounds = array<i64: 8, 128>}, {transform_indices = @transform_1, window_bounds = array<i64: 8, 128>}, {transform_indices = @transform_2, window_bounds = array<i64: 8, 128>}, {transform_indices = @transform_3, window_bounds = array<i64: 1, 5, 8, 128>}]} {
    %c0_i32 = arith.constant 0 : i32
    %0 = arith.cmpi eq, %arg1, %c0_i32 : i32
    %1 = arith.extui %0 : i1 to i32
    %c0_i32_0 = arith.constant 0 : i32
    %2 = arith.cmpi ne, %1, %c0_i32_0 : i32
    scf.if %2 {
      %cst_48 = arith.constant 0.000000e+00 : f32
      %55 = vector.broadcast %cst_48 : f32 to vector<1x5x8x128xf32>
      %c0_49 = arith.constant 0 : index
      %c0_50 = arith.constant 0 : index
      %c0_51 = arith.constant 0 : index
      %c0_52 = arith.constant 0 : index
      %56 = vector.load %arg5[%c0_49, %c0_50, %c0_51, %c0_52] : memref<1x5x8x128xf32, #tpu.memory_space<vmem>>, vector<1x5x8x128xf32>
      tpu.vector_store %arg5[%c0_49, %c0_50, %c0_51, %c0_52], %55 {strides = array<i32>} : memref<1x5x8x128xf32, #tpu.memory_space<vmem>>, vector<1x5x8x128xf32>,
    } else {
    }
    %c0 = arith.constant 0 : index
    %c0_1 = arith.constant 0 : index
    %3 = vector.load %arg2[%c0, %c0_1] : memref<8x128xf32, #tpu.memory_space<vmem>>, vector<8x128xf32>
    %c0_2 = arith.constant 0 : index
    %c0_3 = arith.constant 0 : index
    %4 = vector.load %arg3[%c0_2, %c0_3] : memref<8x128xf32, #tpu.memory_space<vmem>>, vector<8x128xf32>
    %c0_4 = arith.constant 0 : index
    %c0_5 = arith.constant 0 : index
    %5 = vector.load %arg4[%c0_4, %c0_5] : memref<8x128xf32, #tpu.memory_space<vmem>>, vector<8x128xf32>
    %cst = arith.constant 2.500000e+00 : f32
    %6 = vector.broadcast %cst : f32 to vector<8x128xf32>
    %7 = arith.mulf %3, %6 : vector<8x128xf32>
    %8 = arith.subf %7, %5 : vector<8x128xf32>
    %cst_6 = arith.constant 2.500000e+00 : f32
    %9 = vector.broadcast %cst_6 : f32 to vector<8x128xf32>
    %10 = arith.mulf %4, %9 : vector<8x128xf32>
    %11 = arith.subf %10, %5 : vector<8x128xf32>
    %c0_7 = arith.constant 0 : index
    %c0_8 = arith.constant 0 : index
    %c0_9 = arith.constant 0 : index
    %c0_10 = arith.constant 0 : index
    %12 = vector.load %arg5[%c0_7, %c0_8, %c0_9, %c0_10] : memref<1x5x8x128xf32, #tpu.memory_space<vmem>>, vector<1x1x8x128xf32>
    %13 = vector.shape_cast %12 : vector<1x1x8x128xf32> to vector<8x128xf32>
    %14 = vector.shape_cast %8 : vector<8x128xf32> to vector<1x8x128xf32>
    %cst_11 = arith.constant dense<0.000000e+00> : vector<8x128xf32>
    %15 = vector.multi_reduction <add>, %14, %cst_11 [0] : vector<1x8x128xf32> to vector<8x128xf32>
    %16 = arith.addf %13, %15 : vector<8x128xf32>
    %c0_12 = arith.constant 0 : index
    %c0_13 = arith.constant 0 : index
    %c0_14 = arith.constant 0 : index
    %c0_15 = arith.constant 0 : index
    %17 = vector.load %arg5[%c0_12, %c0_13, %c0_14, %c0_15] : memref<1x5x8x128xf32, #tpu.memory_space<vmem>>, vector<1x1x8x128xf32>
    %18 = vector.shape_cast %17 : vector<1x1x8x128xf32> to vector<8x128xf32>
    %19 = vector.shape_cast %16 : vector<8x128xf32> to vector<1x1x8x128xf32>
    tpu.vector_store %arg5[%c0_12, %c0_13, %c0_14, %c0_15], %19 {strides = array<i32>} : memref<1x5x8x128xf32, #tpu.memory_space<vmem>>, vector<1x1x8x128xf32>,
    %c0_16 = arith.constant 0 : index
    %c1 = arith.constant 1 : index
    %c0_17 = arith.constant 0 : index
    %c0_18 = arith.constant 0 : index
    %20 = vector.load %arg5[%c0_16, %c1, %c0_17, %c0_18] : memref<1x5x8x128xf32, #tpu.memory_space<vmem>>, vector<1x1x8x128xf32>
    %21 = vector.shape_cast %20 : vector<1x1x8x128xf32> to vector<8x128xf32>
    %22 = vector.shape_cast %11 : vector<8x128xf32> to vector<1x8x128xf32>
    %cst_19 = arith.constant dense<0.000000e+00> : vector<8x128xf32>
    %23 = vector.multi_reduction <add>, %22, %cst_19 [0] : vector<1x8x128xf32> to vector<8x128xf32>
    %24 = arith.addf %21, %23 : vector<8x128xf32>
    %c0_20 = arith.constant 0 : index
    %c1_21 = arith.constant 1 : index
    %c0_22 = arith.constant 0 : index
    %c0_23 = arith.constant 0 : index
    %25 = vector.load %arg5[%c0_20, %c1_21, %c0_22, %c0_23] : memref<1x5x8x128xf32, #tpu.memory_space<vmem>>, vector<1x1x8x128xf32>
    %26 = vector.shape_cast %25 : vector<1x1x8x128xf32> to vector<8x128xf32>
    %27 = vector.shape_cast %24 : vector<8x128xf32> to vector<1x1x8x128xf32>
    tpu.vector_store %arg5[%c0_20, %c1_21, %c0_22, %c0_23], %27 {strides = array<i32>} : memref<1x5x8x128xf32, #tpu.memory_space<vmem>>, vector<1x1x8x128xf32>,
    %c0_24 = arith.constant 0 : index
    %c2 = arith.constant 2 : index
    %c0_25 = arith.constant 0 : index
    %c0_26 = arith.constant 0 : index
    %28 = vector.load %arg5[%c0_24, %c2, %c0_25, %c0_26] : memref<1x5x8x128xf32, #tpu.memory_space<vmem>>, vector<1x1x8x128xf32>
    %29 = vector.shape_cast %28 : vector<1x1x8x128xf32> to vector<8x128xf32>
    %30 = arith.mulf %8, %8 : vector<8x128xf32>
    %31 = vector.shape_cast %30 : vector<8x128xf32> to vector<1x8x128xf32>
    %cst_27 = arith.constant dense<0.000000e+00> : vector<8x128xf32>
    %32 = vector.multi_reduction <add>, %31, %cst_27 [0] : vector<1x8x128xf32> to vector<8x128xf32>
    %33 = arith.addf %29, %32 : vector<8x128xf32>
    %c0_28 = arith.constant 0 : index
    %c2_29 = arith.constant 2 : index
    %c0_30 = arith.constant 0 : index
    %c0_31 = arith.constant 0 : index
    %34 = vector.load %arg5[%c0_28, %c2_29, %c0_30, %c0_31] : memref<1x5x8x128xf32, #tpu.memory_space<vmem>>, vector<1x1x8x128xf32>
    %35 = vector.shape_cast %34 : vector<1x1x8x128xf32> to vector<8x128xf32>
    %36 = vector.shape_cast %33 : vector<8x128xf32> to vector<1x1x8x128xf32>
    tpu.vector_store %arg5[%c0_28, %c2_29, %c0_30, %c0_31], %36 {strides = array<i32>} : memref<1x5x8x128xf32, #tpu.memory_space<vmem>>, vector<1x1x8x128xf32>,
    %c0_32 = arith.constant 0 : index
    %c3 = arith.constant 3 : index
    %c0_33 = arith.constant 0 : index
    %c0_34 = arith.constant 0 : index
    %37 = vector.load %arg5[%c0_32, %c3, %c0_33, %c0_34] : memref<1x5x8x128xf32, #tpu.memory_space<vmem>>, vector<1x1x8x128xf32>
    %38 = vector.shape_cast %37 : vector<1x1x8x128xf32> to vector<8x128xf32>
    %39 = arith.mulf %11, %11 : vector<8x128xf32>
    %40 = vector.shape_cast %39 : vector<8x128xf32> to vector<1x8x128xf32>
    %cst_35 = arith.constant dense<0.000000e+00> : vector<8x128xf32>
    %41 = vector.multi_reduction <add>, %40, %cst_35 [0] : vector<1x8x128xf32> to vector<8x128xf32>
    %42 = arith.addf %38, %41 : vector<8x128xf32>
    %c0_36 = arith.constant 0 : index
    %c3_37 = arith.constant 3 : index
    %c0_38 = arith.constant 0 : index
    %c0_39 = arith.constant 0 : index
    %43 = vector.load %arg5[%c0_36, %c3_37, %c0_38, %c0_39] : memref<1x5x8x128xf32, #tpu.memory_space<vmem>>, vector<1x1x8x128xf32>
    %44 = vector.shape_cast %43 : vector<1x1x8x128xf32> to vector<8x128xf32>
    %45 = vector.shape_cast %42 : vector<8x128xf32> to vector<1x1x8x128xf32>
    tpu.vector_store %arg5[%c0_36, %c3_37, %c0_38, %c0_39], %45 {strides = array<i32>} : memref<1x5x8x128xf32, #tpu.memory_space<vmem>>, vector<1x1x8x128xf32>,
    %c0_40 = arith.constant 0 : index
    %c4 = arith.constant 4 : index
    %c0_41 = arith.constant 0 : index
    %c0_42 = arith.constant 0 : index
    %46 = vector.load %arg5[%c0_40, %c4, %c0_41, %c0_42] : memref<1x5x8x128xf32, #tpu.memory_space<vmem>>, vector<1x1x8x128xf32>
    %47 = vector.shape_cast %46 : vector<1x1x8x128xf32> to vector<8x128xf32>
    %48 = arith.mulf %8, %11 : vector<8x128xf32>
    %49 = vector.shape_cast %48 : vector<8x128xf32> to vector<1x8x128xf32>
    %cst_43 = arith.constant dense<0.000000e+00> : vector<8x128xf32>
    %50 = vector.multi_reduction <add>, %49, %cst_43 [0] : vector<1x8x128xf32> to vector<8x128xf32>
    %51 = arith.addf %47, %50 : vector<8x128xf32>
    %c0_44 = arith.constant 0 : index
    %c4_45 = arith.constant 4 : index
    %c0_46 = arith.constant 0 : index
    %c0_47 = arith.constant 0 : index
    %52 = vector.load %arg5[%c0_44, %c4_45, %c0_46, %c0_47] : memref<1x5x8x128xf32, #tpu.memory_space<vmem>>, vector<1x1x8x128xf32>
    %53 = vector.shape_cast %52 : vector<1x1x8x128xf32> to vector<8x128xf32>
    %54 = vector.shape_cast %51 : vector<8x128xf32> to vector<1x1x8x128xf32>
    tpu.vector_store %arg5[%c0_44, %c4_45, %c0_46, %c0_47], %54 {strides = array<i32>} : memref<1x5x8x128xf32, #tpu.memory_space<vmem>>, vector<1x1x8x128xf32>,
    return
  }
  func.func @transform_0(%arg0: i32, %arg1: i32) -> (i32, i32) {
    %c1_i32 = arith.constant 1 : i32
    %0 = arith.muli %arg0, %c1_i32 : i32
    %1 = arith.addi %0, %arg1 : i32
    %c0_i32 = arith.constant 0 : i32
    %c0_i32_0 = arith.constant 0 : i32
    return %1, %c0_i32 : i32, i32
  }
  func.func @transform_1(%arg0: i32, %arg1: i32) -> (i32, i32) {
    %c1_i32 = arith.constant 1 : i32
    %0 = arith.muli %arg0, %c1_i32 : i32
    %1 = arith.addi %0, %arg1 : i32
    %c0_i32 = arith.constant 0 : i32
    %c0_i32_0 = arith.constant 0 : i32
    return %1, %c0_i32 : i32, i32
  }
  func.func @transform_2(%arg0: i32, %arg1: i32) -> (i32, i32) {
    %c1_i32 = arith.constant 1 : i32
    %0 = arith.muli %arg0, %c1_i32 : i32
    %1 = arith.addi %0, %arg1 : i32
    %c0_i32 = arith.constant 0 : i32
    %c0_i32_0 = arith.constant 0 : i32
    return %1, %c0_i32 : i32, i32
  }
  func.func @transform_3(%arg0: i32, %arg1: i32) -> (i32, i32, i32, i32) {
    %c0_i32 = arith.constant 0 : i32
    %c0_i32_0 = arith.constant 0 : i32
    %c0_i32_1 = arith.constant 0 : i32
    %c0_i32_2 = arith.constant 0 : i32
    return %arg0, %c0_i32, %c0_i32_0, %c0_i32_1 : i32, i32, i32, i32
  }
}

</mosaic_0001>

<llo_original>
// kernel: tpu_custom_call.1
$region0: #{tpu_custom_call.1}
  #allocation0 [shape = 'u32[]', space=smem, size = 0x4, offset = 0x4, fixed_abs, tag = 'smem constant byte address 0x4 - core index']
  #allocation1 [shape = 'u32[72,128]{1,0:T(1,128)}', space=vmem, size = 0x9000, scoped, tag = 'internal scratch']
  %s0 = inlined_call_operand.hbm [shape: f32[16,128], index: 0, kind: input, shape index: {}]
  %s1 = inlined_call_operand.hbm [shape: f32[16,128], index: 1, kind: input, shape index: {}]
  %s2 = inlined_call_operand.hbm [shape: f32[16,128], index: 2, kind: input, shape index: {}]
  %s3 = inlined_call_operand.hbm [shape: f32[2,5,8,128], index: 3, kind: output, shape index: {}]
  %s4 = sld [smem:[#allocation0]]
  $region61: #{tpu_custom_call.1} parent=0
    _
  %s6 = ssub.s32 1, %s4
  %s7 = scalar_select 0, %s6, %s4
  $region1: #{tpu_custom_call.1} parent=0
    #allocation2 [shape = 'u8[8192]{0}', space=vmem, size = 0x2000, scoped, tag = 'input window, operand 0']
    #allocation3 [shape = 's32[2]{0}', space=sflag, size = 0x8, scoped, tag = 'scoped memory for tpu_custom_call.1']
    #allocation4 [shape = 's32[2]{0}', space=sflag, size = 0x8, scoped, tag = 'scoped memory for tpu_custom_call.1']
    #allocation5 [shape = 'u8[8192]{0}', space=vmem, size = 0x2000, scoped, tag = 'input window, operand 1']
    #allocation6 [shape = 's32[2]{0}', space=sflag, size = 0x8, scoped, tag = 'scoped memory for tpu_custom_call.1']
    #allocation7 [shape = 'u8[8192]{0}', space=vmem, size = 0x2000, scoped, tag = 'input window, operand 2']
    #allocation8 [shape = 'u8[40960]{0}', space=vmem, size = 0xa000, scoped, tag = 'output window, operand 0']
    %8 = vsyncpa [#allocation3], 0
    %s9 = scalar_lea.sflag [#allocation3], 1
    %10 = vsyncpa %s9, 0
    %11 = vsyncpa [#allocation6], 0
    %s12 = scalar_lea.sflag [#allocation6], 1
    %13 = vsyncpa %s12, 0
    %14 = vsyncpa [#allocation4], 0
    %s15 = scalar_lea.sflag [#allocation4], 1
    %16 = vsyncpa %s15, 0
    loop: start=0, step=1, limit=4
    $region2: #{tpu_custom_call.1} parent=1 // loop_pre_header
      _
    $region3: #{tpu_custom_call.1} parent=1 // loop_header
      %s18 = sphi 0, %s22
      %p19 = scmp.ge.s32.totalorder %s18, 4
      %s25 = sphi 0, %s37
      %s26 = sphi 0, %s33
      %s27 = sphi 0, %s25
      %s28 = sphi 0, %s26
      %s29 = sphi 0, %s27
      %s30 = sphi 0, %s28
      %s42 = sphi 0, %s44
      %s45 = sphi 0, %s42
      %s46 = sphi 0, %s45
      %s62 = sphi 0, %s46
      %s70 = sphi 0, %s72
      %s73 = sphi 0, %s70
      %s74 = sphi 0, %s73
      %s90 = sphi 0, %s74
      %s98 = sphi 0, %s100
      %s101 = sphi 0, %s98
      %s102 = sphi 0, %s101
      %s118 = sphi 0, %s102
      %s124 = sphi 0, %s126
      %s127 = sphi 0, %s124
      %s128 = sphi 0, %s127
      %s144 = sphi 0, %s128
    $region4: #{tpu_custom_call.1} parent=1 // loop_header_branch
      %21 = sbr.rel (%p19) target = $region8
    $region5: #{tpu_custom_call.1} parent=1 // loop_body
      %s23 = ssub.s32 %s18, 1
      %s24 = ssub.s32 %s18, 2
      %s31 = sadd.s32 1, %s26
      %p32 = scmp.ge.s32.totalorder %s31, 1
      %s33 = scalar_select %p32, 0, %s31
      %s34 = sadd.s32 1, %s25
      %s35 = scalar_select %p32, %s34, %s25
      %p36 = scmp.ge.s32.totalorder %s35, 2
      %s37 = scalar_select %p36, 0, %s35
      %s38 = sadd.s32 %s25, %s26
      %s39 = sadd.s32 %s37, %s33
      %s40 = ssub.s32 %s38, %s39
      %p41 = scmp.eq.s32.totalorder %s40, 0
      %s43 = sadd.s32 %s42, 1
      %s44 = scalar_select %p41, %s42, %s43
      %p47 = pneg %p41
      %p48 = scmp.eq.s32.totalorder %s18, 1
      %p49 = por %p47, %p48
      %p50 = scmp.ne.s32.totalorder %s42, %s45
      %p51 = scmp.eq.s32.totalorder %s18, 0
      %p52 = por %p50, %p51
      %p53 = scmp.ne.s32.totalorder %s42, %s45
      %p54 = scmp.eq.s32.totalorder %s23, 1
      %p55 = por %p53, %p54
      %p56 = scmp.ne.s32.totalorder %s45, %s46
      %p57 = scmp.eq.s32.totalorder %s23, 0
      %p58 = por %p56, %p57
      %p59 = scmp.ne.s32.totalorder %s45, %s46
      %p60 = scmp.eq.s32.totalorder %s24, 1
      %p61 = por %p59, %p60
      %p63 = scmp.ne.s32.totalorder %s46, %s62
      %p64 = scmp.eq.s32.totalorder %s24, 0
      %p65 = por %p63, %p64
      %s66 = sadd.s32 %s25, %s26
      %s67 = sadd.s32 %s37, %s33
      %s68 = ssub.s32 %s66, %s67
      %p69 = scmp.eq.s32.totalorder %s68, 0
      %s71 = sadd.s32 %s70, 1
      %s72 = scalar_select %p69, %s70, %s71
      %p75 = pneg %p69
      %p76 = scmp.eq.s32.totalorder %s18, 1
      %p77 = por %p75, %p76
      %p78 = scmp.ne.s32.totalorder %s70, %s73
      %p79 = scmp.eq.s32.totalorder %s18, 0
      %p80 = por %p78, %p79
      %p81 = scmp.ne.s32.totalorder %s70, %s73
      %p82 = scmp.eq.s32.totalorder %s23, 1
      %p83 = por %p81, %p82
      %p84 = scmp.ne.s32.totalorder %s73, %s74
      %p85 = scmp.eq.s32.totalorder %s23, 0
      %p86 = por %p84, %p85
      %p87 = scmp.ne.s32.totalorder %s73, %s74
      %p88 = scmp.eq.s32.totalorder %s24, 1
      %p89 = por %p87, %p88
      %p91 = scmp.ne.s32.totalorder %s74, %s90
      %p92 = scmp.eq.s32.totalorder %s24, 0
      %p93 = por %p91, %p92
      %s94 = sadd.s32 %s25, %s26
      %s95 = sadd.s32 %s37, %s33
      %s96 = ssub.s32 %s94, %s95
      %p97 = scmp.eq.s32.totalorder %s96, 0
      %s99 = sadd.s32 %s98, 1
      %s100 = scalar_select %p97, %s98, %s99
      %p103 = pneg %p97
      %p104 = scmp.eq.s32.totalorder %s18, 1
      %p105 = por %p103, %p104
      %p106 = scmp.ne.s32.totalorder %s98, %s101
      %p107 = scmp.eq.s32.totalorder %s18, 0
      %p108 = por %p106, %p107
      %p109 = scmp.ne.s32.totalorder %s98, %s101
      %p110 = scmp.eq.s32.totalorder %s23, 1
      %p111 = por %p109, %p110
      %p112 = scmp.ne.s32.totalorder %s101, %s102
      %p113 = scmp.eq.s32.totalorder %s23, 0
      %p114 = por %p112, %p113
      %p115 = scmp.ne.s32.totalorder %s101, %s102
      %p116 = scmp.eq.s32.totalorder %s24, 1
      %p117 = por %p115, %p116
      %p119 = scmp.ne.s32.totalorder %s102, %s118
      %p120 = scmp.eq.s32.totalorder %s24, 0
      %p121 = por %p119, %p120
      %s122 = ssub.s32 %s25, %s37
      %p123 = scmp.eq.s32.totalorder %s122, 0
      %s125 = sadd.s32 %s124, 1
      %s126 = scalar_select %p123, %s124, %s125
      %p129 = pneg %p123
      %p130 = scmp.eq.s32.totalorder %s18, 1
      %p131 = por %p129, %p130
      %p132 = scmp.ne.s32.totalorder %s124, %s127
      %p133 = scmp.eq.s32.totalorder %s18, 0
      %p134 = por %p132, %p133
      %p135 = scmp.ne.s32.totalorder %s124, %s127
      %p136 = scmp.eq.s32.totalorder %s23, 1
      %p137 = por %p135, %p136
      %p138 = scmp.ne.s32.totalorder %s127, %s128
      %p139 = scmp.eq.s32.totalorder %s23, 0
      %p140 = por %p138, %p139
      %p141 = scmp.ne.s32.totalorder %s127, %s128
      %p142 = scmp.eq.s32.totalorder %s24, 1
      %p143 = por %p141, %p142
      %p145 = scmp.ne.s32.totalorder %s128, %s144
      %p146 = scmp.eq.s32.totalorder %s24, 0
      %p147 = por %p145, %p146
      %p148 = scmp.le.s32.totalorder 1, %s18
      %p149 = scmp.lt.s32.totalorder %s18, 3
      %p150 = pnand %p148, %p149
      %p151 = pneg %p150
      // Predicated region
      $region9: #{tpu_custom_call.1} parent=5 // pred_check
        _
      $region10: #{tpu_custom_call.1} parent=5 // pred_check_branch
        %153 = sbr.rel (%p150) target = $region12
      $region11: #{tpu_custom_call.1} parent=5 // pred_region
        %s154 = ssub.s32 %s18, 1
      $region12: #{tpu_custom_call.1} parent=5 // pred_fallthru
        _
      %p155 = scmp.lt.s32.totalorder %s18, 2
      // Predicated region
      $region13: #{tpu_custom_call.1} parent=5 // pred_check
        %p156 = pneg %p155
      $region14: #{tpu_custom_call.1} parent=5 // pred_check_branch
        %158 = sbr.rel (%p156) target = $region16
      $region15: #{tpu_custom_call.1} parent=5 // pred_region
        // Predicated region
        $region17: #{tpu_custom_call.1} parent=15 // pred_check
          %p159 = pneg %p52
        $region18: #{tpu_custom_call.1} parent=15 // pred_check_branch
          %161 = sbr.rel (%p159) target = $region20
        $region19: #{tpu_custom_call.1} parent=15 // pred_region
          %s162 = sand.u32 %s42, 1
          %s163 = scalar_lea.sflag [#allocation3], %s162
          %s164 = sand.u32 %s42, 1
          %s165 = smul.addr %s164, 8
          %s166 = scalar_lea.vmem [#allocation2], %s165
          %s167 = sadd.s32 %s25, %s26
          %169 = vsyncadd %s163, 0
          %s170 = smul.addr %s167, 8
          %s171 = scalar_lea.hbm %s0, %s170
          %s173 = sshll.u32 %s171, 4
          %s174 = int_to_ptr.hbm [resolvable:$true] %s173
          %s175 = sshll.u32 %s166, 4
          %s176 = int_to_ptr.vmem [resolvable:$true] %s175
          %178 = dma.hbm_to_vmem [thread:$0]  %s174, 128, %s176, %s163
        $region20: #{tpu_custom_call.1} parent=15 // pred_fallthru
          _
        // Predicated region
        $region21: #{tpu_custom_call.1} parent=15 // pred_check
          %p179 = pneg %p80
        $region22: #{tpu_custom_call.1} parent=15 // pred_check_branch
          %181 = sbr.rel (%p179) target = $region24
        $region23: #{tpu_custom_call.1} parent=15 // pred_region
          %s182 = sand.u32 %s18, 1
          %s183 = scalar_lea.sflag [#allocation6], %s182
          %s184 = sand.u32 %s70, 1
          %s185 = smul.addr %s184, 8
          %s186 = scalar_lea.vmem [#allocation5], %s185
          %s187 = sadd.s32 %s25, %s26
          %189 = vsyncadd %s183, 0
          %s190 = smul.addr %s187, 8
          %s191 = scalar_lea.hbm %s1, %s190
          %s193 = sshll.u32 %s191, 4
          %s194 = int_to_ptr.hbm [resolvable:$true] %s193
          %s195 = sshll.u32 %s186, 4
          %s196 = int_to_ptr.vmem [resolvable:$true] %s195
          %198 = dma.hbm_to_vmem [thread:$0]  %s194, 128, %s196, %s183
        $region24: #{tpu_custom_call.1} parent=15 // pred_fallthru
          _
        // Predicated region
        $region25: #{tpu_custom_call.1} parent=15 // pred_check
          %p199 = pneg %p108
        $region26: #{tpu_custom_call.1} parent=15 // pred_check_branch
          %201 = sbr.rel (%p199) target = $region28
        $region27: #{tpu_custom_call.1} parent=15 // pred_region
          %s202 = sand.u32 %s18, 1
          %s203 = scalar_lea.sflag [#allocation6], %s202
          %s204 = sand.u32 %s98, 1
          %s205 = smul.addr %s204, 8
          %s206 = scalar_lea.vmem [#allocation7], %s205
          %s207 = sadd.s32 %s25, %s26
          %209 = vsyncadd %s203, 0
          %s210 = smul.addr %s207, 8
          %s211 = scalar_lea.hbm %s2, %s210
          %s213 = sshll.u32 %s211, 4
          %s214 = int_to_ptr.hbm [resolvable:$true] %s213
          %s215 = sshll.u32 %s206, 4
          %s216 = int_to_ptr.vmem [resolvable:$true] %s215
          %218 = dma.hbm_to_vmem [thread:$0]  %s214, 128, %s216, %s203
        $region28: #{tpu_custom_call.1} parent=15 // pred_fallthru
          _
      $region16: #{tpu_custom_call.1} parent=5 // pred_fallthru
        _
      %p219 = scmp.le.s32.totalorder 1, %s18
      %p220 = scmp.lt.s32.totalorder %s18, 3
      %p221 = pnand %p219, %p220
      %p222 = pneg %p221
      // Predicated region
      $region29: #{tpu_custom_call.1} parent=5 // pred_check
        _
      $region30: #{tpu_custom_call.1} parent=5 // pred_check_branch
        %224 = sbr.rel (%p221) target = $region32
      $region31: #{tpu_custom_call.1} parent=5 // pred_region
        %s225 = ssub.s32 %s18, 1
        %s226 = sand.u32 %s45, 1
        %s227 = scalar_lea.sflag [#allocation3], %s226
        %s228 = sand.u32 %s45, 1
        %s229 = smul.addr %s228, 8
        %s230 = scalar_lea.vmem [#allocation2], %s229
        // Predicated region
        $region33: #{tpu_custom_call.1} parent=31 // pred_check
          %p231 = pneg %p58
        $region34: #{tpu_custom_call.1} parent=31 // pred_check_branch
          %233 = sbr.rel (%p231) target = $region36
        $region35: #{tpu_custom_call.1} parent=31 // pred_region
          %235 = dma.done %s227, 128
        $region36: #{tpu_custom_call.1} parent=31 // pred_fallthru
          _
        %s236 = sand.u32 %s23, 1
        %s237 = scalar_lea.sflag [#allocation6], %s236
        %s238 = sand.u32 %s73, 1
        %s239 = smul.addr %s238, 8
        %s240 = scalar_lea.vmem [#allocation5], %s239
        // Predicated region
        $region37: #{tpu_custom_call.1} parent=31 // pred_check
          %p241 = pneg %p86
        $region38: #{tpu_custom_call.1} parent=31 // pred_check_branch
          %243 = sbr.rel (%p241) target = $region40
        $region39: #{tpu_custom_call.1} parent=31 // pred_region
          %245 = dma.done %s237, 128
        $region40: #{tpu_custom_call.1} parent=31 // pred_fallthru
          _
        %s246 = sand.u32 %s23, 1
        %s247 = scalar_lea.sflag [#allocation6], %s246
        %s248 = sand.u32 %s101, 1
        %s249 = smul.addr %s248, 8
        %s250 = scalar_lea.vmem [#allocation7], %s249
        // Predicated region
        $region41: #{tpu_custom_call.1} parent=31 // pred_check
          %p251 = pneg %p114
        $region42: #{tpu_custom_call.1} parent=31 // pred_check_branch
          %253 = sbr.rel (%p251) target = $region44
        $region43: #{tpu_custom_call.1} parent=31 // pred_region
          %255 = dma.done %s247, 128
        $region44: #{tpu_custom_call.1} parent=31 // pred_fallthru
          _
        %s256 = sand.u32 %s45, 1
        %s257 = scalar_lea.sflag [#allocation3], %s256
        %s258 = sand.u32 %s45, 1
        %s259 = smul.addr %s258, 8
        %s260 = scalar_lea.vmem [#allocation2], %s259
        %p261 = pneg %p58
        %p262 = pneg %p55
        %s263 = sand.u32 %s23, 1
        %s264 = scalar_lea.sflag [#allocation6], %s263
        %s265 = sand.u32 %s73, 1
        %s266 = smul.addr %s265, 8
        %s267 = scalar_lea.vmem [#allocation5], %s266
        %p268 = pneg %p86
        %p269 = pneg %p83
        %s270 = sand.u32 %s23, 1
        %s271 = scalar_lea.sflag [#allocation6], %s270
        %s272 = sand.u32 %s101, 1
        %s273 = smul.addr %s272, 8
        %s274 = scalar_lea.vmem [#allocation7], %s273
        %p275 = pneg %p114
        %p276 = pneg %p111
        %p277 = pneg %p140
        %p278 = pneg %p137
        %s279 = sand.u32 %s127, 1
        %s280 = scalar_lea.sflag [#allocation4], %s279
        %s281 = sand.u32 %s127, 1
        %s282 = smul.addr %s281, 40
        %s283 = scalar_lea.vmem [#allocation8], %s282
        %s284 = sadd.s32 %s27, %s28
        %s285 = sadd.s32 %s27, %s28
        %s286 = sadd.s32 %s27, %s28
        %p287 = scmp.eq.s32.totalorder %s28, 0
        // Predicated region
        $region45: #{tpu_custom_call.1} parent=31 // pred_check
          %p288 = pneg %p287
        $region46: #{tpu_custom_call.1} parent=31 // pred_check_branch
          %290 = sbr.rel (%p288) target = $region48
        $region47: #{tpu_custom_call.1} parent=31 // pred_region
          %291 = vst [vmem:[%s283] sm:$0xff] 0.0
          %292 = vst [vmem:[%s283 + $0x8] sm:$0xff] 0.0
          %293 = vst [vmem:[%s283 + $0x10] sm:$0xff] 0.0
          %294 = vst [vmem:[%s283 + $0x18] sm:$0xff] 0.0
          %295 = vst [vmem:[%s283 + $0x20] sm:$0xff] 0.0
        $region48: #{tpu_custom_call.1} parent=31 // pred_fallthru
          _
        %v296 = vld [vmem:[%s230] sm:$0xff]
        %v297 = vld [vmem:[%s240] sm:$0xff]
        %v298 = vld [vmem:[%s250] sm:$0xff]
        %v299 = vmul.f32 %v296, 2.5
        %v300 = vsub.f32 %v299, %v298
        %v301 = vmul.f32 %v297, 2.5
        %v302 = vsub.f32 %v301, %v298
        %v303 = vld [vmem:[%s283] sm:$0xff]
        %v304 = vadd.f32 %v300, 0.0
        %v305 = vadd.f32 %v303, %v304
        %306 = vst [vmem:[%s283] sm:$0xff] %v305
        %s307 = scalar_lea.vmem %s283, 8 [#allocation8]
        %v308 = vld [vmem:[%s307] sm:$0xff]
        %v309 = vadd.f32 %v302, 0.0
        %v310 = vadd.f32 %v308, %v309
        %311 = vst [vmem:[%s307] sm:$0xff] %v310
        %s312 = scalar_lea.vmem %s283, 16 [#allocation8]
        %v313 = vld [vmem:[%s312] sm:$0xff]
        %v314 = vmul.f32 %v300, %v300
        %v315 = vadd.f32 %v314, 0.0
        %v316 = vadd.f32 %v313, %v315
        %317 = vst [vmem:[%s312] sm:$0xff] %v316
        %s318 = scalar_lea.vmem %s283, 24 [#allocation8]
        %v319 = vld [vmem:[%s318] sm:$0xff]
        %v320 = vmul.f32 %v302, %v302
        %v321 = vadd.f32 %v320, 0.0
        %v322 = vadd.f32 %v319, %v321
        %323 = vst [vmem:[%s318] sm:$0xff] %v322
        %s324 = scalar_lea.vmem %s283, 32 [#allocation8]
        %v325 = vld [vmem:[%s324] sm:$0xff]
        %v326 = vmul.f32 %v300, %v302
        %v327 = vadd.f32 %v326, 0.0
        %v328 = vadd.f32 %v325, %v327
        %329 = vst [vmem:[%s324] sm:$0xff] %v328
        %s330 = sand.u32 %s127, 1
        %s331 = scalar_lea.sflag [#allocation4], %s330
        %s332 = sand.u32 %s127, 1
        %s333 = smul.addr %s332, 40
        %s334 = scalar_lea.vmem [#allocation8], %s333
        // Predicated region
        $region49: #{tpu_custom_call.1} parent=31 // pred_check
          %p335 = pneg %p137
        $region50: #{tpu_custom_call.1} parent=31 // pred_check_branch
          %337 = sbr.rel (%p335) target = $region52
        $region51: #{tpu_custom_call.1} parent=31 // pred_region
          %339 = vsyncadd %s331, 0
          %s340 = smul.addr %s27, 5
          %s341 = smul.addr %s340, 8
          %s342 = scalar_lea.hbm %s3, %s341
          %s343 = sshll.u32 %s334, 4
          %s344 = int_to_ptr.vmem [resolvable:$true] %s343
          %s345 = sshll.u32 %s342, 4
          %s346 = int_to_ptr.hbm [resolvable:$true] %s345
          %351 = dma.vmem_to_hbm [thread:$0]  %s344, 640, %s346, %s331, 128, 128, 8
        $region52: #{tpu_custom_call.1} parent=31 // pred_fallthru
          _
      $region32: #{tpu_custom_call.1} parent=5 // pred_fallthru
        _
      %p352 = scmp.le.s32.totalorder 2, %s18
      // Predicated region
      $region53: #{tpu_custom_call.1} parent=5 // pred_check
        %p353 = pneg %p352
      $region54: #{tpu_custom_call.1} parent=5 // pred_check_branch
        %355 = sbr.rel (%p353) target = $region56
      $region55: #{tpu_custom_call.1} parent=5 // pred_region
        %s356 = ssub.s32 %s18, 2
        // Predicated region
        $region57: #{tpu_custom_call.1} parent=55 // pred_check
          %p357 = pneg %p143
        $region58: #{tpu_custom_call.1} parent=55 // pred_check_branch
          %359 = sbr.rel (%p357) target = $region60
        $region59: #{tpu_custom_call.1} parent=55 // pred_region
          %s360 = sand.u32 %s128, 1
          %s361 = scalar_lea.sflag [#allocation4], %s360
          %s362 = sand.u32 %s128, 1
          %s363 = smul.addr %s362, 40
          %s364 = scalar_lea.vmem [#allocation8], %s363
          %366 = dma.done %s361, 640
        $region60: #{tpu_custom_call.1} parent=55 // pred_fallthru
          _
      $region56: #{tpu_custom_call.1} parent=5 // pred_fallthru
        _
    $region6: #{tpu_custom_call.1} parent=1 // loop_footer
      %s22 = sadd.s32 1, %s18
    $region7: #{tpu_custom_call.1} parent=1 // loop_footer_branch
      %17 = sbr.rel target = $region3
    $region8: #{tpu_custom_call.1} parent=1 // loop_exit
      _
    %367 = vsyncpa [#allocation3], 1
    %s368 = scalar_lea.sflag [#allocation3], 1
    %369 = vsyncpa %s368, 1
    %370 = vsyncpa [#allocation6], 1
    %s371 = scalar_lea.sflag [#allocation6], 1
    %372 = vsyncpa %s371, 1
    %373 = vsyncpa [#allocation4], 1
    %s374 = scalar_lea.sflag [#allocation4], 1
    %375 = vsyncpa %s374, 1

</llo_original>
